<compile_context>
chip_gen: v5e
topology: v5e:2x2
jax: 0.10.0
libtpu: 0.0.40
codegen_flags: <defaults>
</compile_context>

<pallas_src>
import functools

import jax
import jax.numpy as jnp
from jax import lax
from jax.experimental import pallas as pl
from jax.experimental.pallas import tpu as pltpu


def _round_up(x, m):
    return ((x + m - 1) // m) * m


def _static_int_pow(x, n):
    """x**n for a static positive integer n using only VPU multiplies."""
    assert n >= 1
    result, base = None, x
    while n:
        if n & 1:
            result = base if result is None else result * base
        n >>= 1
        if n:
            base = base * base
    return result


def _choose_pack_factor(n_rows, hw):
    """Pick k | n_rows packing k spatial rows of hw elems into one lane-row,
    minimizing padded lanes per original row.  k == 1 means no packing."""
    if hw <= 0:
        return 1
    kmax = min(max(1, 512 // hw), max(1, n_rows))
    best_k, best_cost = 1, float(_round_up(hw, 128))
    for kk in range(2, kmax + 1):
        if n_rows % kk:
            continue
        cost = _round_up(kk * hw, 128) / kk
        if cost + 1e-9 < best_cost:
            best_k, best_cost = kk, cost
    return best_k


def _gem_kernel(*refs, eps, hw, k, pw, col_tile, n_col, p_static, compute_dtype):
    """One (row_tile, col_tile) block of the packed (rows, k*HW) slab.

    refs = ([p_smem,] x_ref, o_ref[, acc_ref])
      p_smem  : (1,) f32 in SMEM (only when p is a traced/learnable parameter)
      x_ref   : (row_tile, col_tile) input tile, native dtype
      o_ref   : (1, k, row_tile) output tile, segment-major, lane-dense
      acc_ref : (row_tile, k) f32 partial sums (only when the width is chunked)
    """
    idx = 0
    if p_static is None:
        p_ref = refs[idx]
        idx += 1
    x_ref, o_ref = refs[idx], refs[idx + 1]
    acc_ref = refs[idx + 2] if n_col > 1 else None

    if p_static is None:
        p = p_ref[0]                               # f32 scalar from SMEM
        p_c = p.astype(compute_dtype)
        inv_p = 1.0 / p
    else:
        inv_p = 1.0 / float(p_static)

    # clamp + pow in compute_dtype (per-tile cast; no HBM upcast in the wrapper)
    xc = jnp.maximum(x_ref[...].astype(compute_dtype), eps)
    if p_static is None:
        xp = jnp.power(xc, p_c)                    # exp(p*log x) on the EUP
    else:
        pf = float(p_static)
        if pf == int(pf) and 1 <= int(pf) <= 64:
            xp = _static_int_pow(xc, int(pf))      # VPU multiplies only (no EUP)
        else:
            xp = jnp.power(xc, jnp.asarray(pf, compute_dtype))

    if n_col > 1:
        # Width-chunked (huge H*W): mask lanes past the logical row width so the
        # ragged last chunk's block padding does not pollute the running sum.
        j = pl.program_id(1)
        lane = lax.broadcasted_iota(jnp.int32, xp.shape, 1) + j * col_tile
        xp = jnp.where(lane < pw, xp, jnp.zeros_like(xp))

    if k == 1:
        sums = jnp.sum(xp.astype(jnp.float32), axis=-1, keepdims=True)   # (rows, 1)
    else:
        # Segmented sum of the k packed rows per lane-row via one tiny MXU
        # matmul (the MXU is otherwise idle).  S[r, c] = 1 iff lane r is in
        # segment c; built from iotas (no integer division needed).
        r = lax.broadcasted_iota(jnp.int32, (k * hw, k), 0)
        c = lax.broadcasted_iota(jnp.int32, (k * hw, k), 1)
        seg = jnp.logical_and(r >= c * hw, r < (c + 1) * hw)
        sums = jnp.dot(xp, seg.astype(compute_dtype),
                       preferred_element_type=jnp.float32)               # (rows, k)

    def _finalize(s_f32):
        m = s_f32 * (1.0 / hw)                     # mean over H*W, f32
        y = jnp.power(m, inv_p).astype(o_ref.dtype)        # (rows, k)
        rows_blk = y.shape[0]
        for jj in range(k):                        # lane-dense stores, one per segment
            o_ref[0:1, jj:jj + 1, :] = y[:, jj:jj + 1].reshape(1, 1, rows_blk)

    if n_col > 1:
        @pl.when(pl.program_id(1) == 0)
        def _():
            acc_ref[...] = jnp.zeros_like(acc_ref)

        acc_ref[...] += sums

        @pl.when(pl.program_id(1) == n_col - 1)
        def _():
            _finalize(acc_ref[...])
    else:
        _finalize(sums)


def gem_pallas(x, p, eps=1e-6, *, compute_dtype=None, row_tile=None, col_tile=None):
    """GeM pooling: (B, C, H, W) -> (B, C).

    `p` may be a learnable (1,)/() array (dynamic path) or a Python number
    (static fast path).  `compute_dtype` defaults to f32; bf16 halves EUP cost
    on v6e/v7x while the mean and final root stay in f32.
    """
    B, C, H, W = x.shape
    R, HW = B * C, H * W
    out_dtype = x.dtype
    cdt = jnp.float32 if compute_dtype is None else compute_dtype
    isz = jnp.dtype(x.dtype).itemsize
    dynamic_p = not isinstance(p, (int, float))

    # --- row packing for small spatial maps ---------------------------------
    k = _choose_pack_factor(R, HW)
    rows = R // k                    # packed rows
    PW = k * HW                      # packed row width (reduction axis on lanes)
    pw_pad = _round_up(PW, 128)

    # Contiguous NCHW -> (rows, PW) is a pure reshape: no HBM copy, no upcast.
    x2 = x.reshape(rows, PW)

    # --- generation-aware VMEM budget ---------------------------------------
    try:
        vmem_cap = int(pltpu.get_tpu_info().vmem_capacity_bytes)
    except Exception:
        vmem_cap = 64 * 1024 * 1024              # v7x-safe fallback
    vmem_limit = max(32 * 1024 * 1024,
                     min(vmem_cap * 3 // 4, 96 * 1024 * 1024))
    work = int(vmem_limit * 0.8)                 # headroom for compiler temps
    # per-element cost: double-buffered input + up to ~3 f32 full-tile temps
    per_elem = 2 * isz + 3 * 4

    # --- width chunking guard (only for absurdly large H*W) -----------------
    if col_tile is None:
        if 8 * pw_pad * per_elem > work:
            col_tile = max(128, (work // (8 * per_elem)) // 128 * 128)
        else:
            col_tile = PW
    col_tile = int(col_tile)
    n_col = int(pl.cdiv(PW, col_tile))
    assert n_col == 1 or k == 1, "width chunking requires unpacked rows"
    col_pad = _round_up(col_tile, 128)

    # --- row tile: as big as the budget allows, lane/sublane aligned --------
    if row_tile is None:
        row_bytes = col_pad * per_elem + 2 * _round_up(k, 8) * 4
        if n_col > 1:
            row_bytes += 128 * 4                 # f32 accumulator row
        row_tile = max(8, work // row_bytes)
        row_tile = (row_tile // 128 * 128) if row_tile >= 128 else max(8, row_tile // 8 * 8)
    row_tile = int(row_tile)
    if row_tile >= rows:
        if rows > 8:
            # keep >= 2 row tiles so the "parallel" axis feeds both v7x TensorCores
            half = -(-rows // 2)
            row_tile = _round_up(half, 128 if half >= 128 else 8)
        else:
            row_tile = rows
    n_row = int(pl.cdiv(rows, row_tile))

    kernel = functools.partial(
        _gem_kernel, eps=float(eps), hw=HW, k=k, pw=PW, col_tile=col_tile,
        n_col=n_col, p_static=None if dynamic_p else float(p), compute_dtype=cdt)

    in_specs = [pl.BlockSpec((row_tile, col_tile), lambda i, j: (i, j))]
    operands = [x2]
    if dynamic_p:
        # Learnable scalar p lives in SMEM (4 bytes; per-step cost negligible).
        in_specs = [pl.BlockSpec(memory_space=pltpu.MemorySpace.SMEM)] + in_specs
        operands = [jnp.asarray(p, jnp.float32).reshape(1)] + operands

    scratch = []
    if n_col > 1:
        scratch.append(pltpu.VMEM((row_tile, k), jnp.float32))

    out3 = pl.pallas_call(
        kernel,
        out_shape=jax.ShapeDtypeStruct((n_row, k, row_tile), out_dtype),
        grid_spec=pltpu.PrefetchScalarGridSpec(
            num_scalar_prefetch=0,
            grid=(n_row, n_col),
            in_specs=in_specs,
            out_specs=pl.BlockSpec((1, k, row_tile), lambda i, j: (i, 0, 0)),
            scratch_shapes=scratch),
        compiler_params=pltpu.CompilerParams(
            dimension_semantics=("parallel", "arbitrary"),
            vmem_limit_bytes=int(vmem_limit)),
    )(*operands)

    # (n_row, k, row_tile) segment-major -> original (B*C) row order.
    # This transpose touches only ~B*C elements: negligible vs the input.
    return out3.transpose(0, 2, 1).reshape(-1)[:R].reshape(B, C)


def gem_reference(x, p_scalar, eps=1e-6):
    xf = x.astype(jnp.float32)
    m = jnp.mean(jnp.power(jnp.maximum(xf, eps), p_scalar), axis=(-2, -1))
    return jnp.power(m, 1.0 / p_scalar)


if __name__ == "__main__":
    key = jax.random.PRNGKey(0)
    eps = 1e-6
    # Parameter init matches torch: p = ones(1) * 3 (learnable -> dynamic path)
    p_param = jnp.ones((1,), dtype=jnp.float32) * 3.0

    # Test 1: canonical small shape, dynamic p, no packing (HW = 256).
    B, C, H, W = 2, 4, 16, 16
    x1 = jax.random.normal(key, (B, C, H, W), dtype=jnp.float32)
    out1 = jax.block_until_ready(gem_pallas(x1, p_param, eps=eps))
    ref1 = gem_reference(x1, 3.0, eps)
    assert out1.shape == (B, C), out1.shape
    assert jnp.allclose(out1, ref1, rtol=1e-4, atol=1e-5), (out1, ref1)

    # Test 2: small spatial map (8x8) with row count 15 -> row packing (k=5),
    # MXU segmented sum, segment-major output un-interleave.
    x2 = jax.random.normal(jax.random.PRNGKey(1), (3, 5, 8, 8), dtype=jnp.float32)
    out2 = jax.block_until_ready(gem_pallas(x2, p_param, eps=eps))
    ref2 = gem_reference(x2, 3.0, eps)
    assert out2.shape == (3, 5), out2.shape
    assert jnp.allclose(out2, ref2, rtol=1e-4, atol=1e-5), (out2, ref2)

    # Test 3: forced width chunking (HW = 400, col_tile = 128 -> 4 chunks with
    # a ragged last chunk) to exercise the accumulator + lane masking path.
    x3 = jax.random.normal(jax.random.PRNGKey(2), (2, 4, 20, 20), dtype=jnp.float32)
    out3 = jax.block_until_ready(gem_pallas(x3, p_param, eps=eps, col_tile=128))
    ref3 = gem_reference(x3, 3.0, eps)
    assert out3.shape == (2, 4), out3.shape
    assert jnp.allclose(out3, ref3, rtol=1e-4, atol=1e-5), (out3, ref3)

    # Test 4: static p fast path (integer p=3 -> VPU multiplies, no EUP pow).
    out4 = jax.block_until_ready(gem_pallas(x1, 3.0, eps=eps))
    assert jnp.allclose(out4, ref1, rtol=1e-4, atol=1e-5), (out4, ref1)

    # Test 5: bf16 input stays bf16 in HBM (no wrapper upcast), f32 compute.
    x5 = x1.astype(jnp.bfloat16)
    out5 = jax.block_until_ready(gem_pallas(x5, p_param, eps=eps))
    ref5 = gem_reference(x5, 3.0, eps)
    assert out5.dtype == jnp.bfloat16
    assert jnp.allclose(out5.astype(jnp.float32), ref5, rtol=2e-2, atol=2e-2)

    # Test 6: bf16 compute path (v6e/v7x EUP relief), f32 accumulation/root.
    out6 = jax.block_until_ready(
        gem_pallas(x1, p_param, eps=eps, compute_dtype=jnp.bfloat16))
    assert jnp.allclose(out6, ref1, rtol=5e-2, atol=5e-2), (out6, ref1)

    print("KERNEL_OK")
</pallas_src>

<mosaic_0001>
module attributes {stable_mosaic.version = 11 : i64} {
  func.func @_gem_kernel(%arg0: i32, %arg1: i32, %arg2: memref<1xf32, #tpu.memory_space<smem>>, %arg3: memref<8x256xf32, #tpu.memory_space<vmem>>, %arg4: memref<1x1x8xf32, #tpu.memory_space<vmem>>) attributes {dimension_semantics = [#tpu.dimension_semantics<parallel>, #tpu.dimension_semantics<arbitrary>], iteration_bounds = array<i64: 1, 1>, scalar_prefetch = 0 : i64, scratch_operands = 0 : i64, tpu.core_type = #tpu.core_type<tc>, window_params = [{transform_indices = @transform_0, window_bounds = array<i64: 1>}, {transform_indices = @transform_1, window_bounds = array<i64: 8, 256>}, {transform_indices = @transform_2, window_bounds = array<i64: 1, 1, 8>}]} {
    %c0 = arith.constant 0 : index
    %0 = memref.load %arg2[%c0] : memref<1xf32, #tpu.memory_space<smem>>
    %cst = arith.constant 1.000000e+00 : f32
    %1 = arith.divf %cst, %0 : f32
    %c0_0 = arith.constant 0 : index
    %c0_1 = arith.constant 0 : index
    %2 = vector.load %arg3[%c0_0, %c0_1] : memref<8x256xf32, #tpu.memory_space<vmem>>, vector<8x256xf32>
    %cst_2 = arith.constant 9.99999997E-7 : f32
    %3 = vector.broadcast %cst_2 : f32 to vector<8x256xf32>
    %4 = arith.maximumf %2, %3 : vector<8x256xf32>
    %5 = vector.broadcast %0 : f32 to vector<8x256xf32>
    %6 = math.powf %4, %5 : vector<8x256xf32>
    %cst_3 = arith.constant dense<0.000000e+00> : vector<8xf32>
    %7 = vector.multi_reduction <add>, %6, %cst_3 [1] : vector<8x256xf32> to vector<8xf32>
    %8 = vector.shape_cast %7 : vector<8xf32> to vector<8x1xf32>
    %cst_4 = arith.constant 3.906250e-03 : f32
    %9 = vector.broadcast %cst_4 : f32 to vector<8x1xf32>
    %10 = arith.mulf %8, %9 : vector<8x1xf32>
    %11 = vector.broadcast %1 : f32 to vector<8x1xf32>
    %12 = math.powf %10, %11 : vector<8x1xf32>
    %13 = vector.shape_cast %12 : vector<8x1xf32> to vector<1x1x8xf32>
    %c0_5 = arith.constant 0 : index
    %c0_6 = arith.constant 0 : index
    %c0_7 = arith.constant 0 : index
    %14 = vector.load %arg4[%c0_5, %c0_6, %c0_7] : memref<1x1x8xf32, #tpu.memory_space<vmem>>, vector<1x1x8xf32>
    tpu.vector_store %arg4[%c0_5, %c0_6, %c0_7], %13 {strides = array<i32>} : memref<1x1x8xf32, #tpu.memory_space<vmem>>, vector<1x1x8xf32>,
    return
  }
  func.func @transform_0(%arg0: i32, %arg1: i32) -> i32 {
    %c0_i32 = arith.constant 0 : i32
    %c0_i32_0 = arith.constant 0 : i32
    return %c0_i32 : i32
  }
  func.func @transform_1(%arg0: i32, %arg1: i32) -> (i32, i32) {
    %c0_i32 = arith.constant 0 : i32
    return %arg0, %arg1 : i32, i32
  }
  func.func @transform_2(%arg0: i32, %arg1: i32) -> (i32, i32, i32) {
    %c0_i32 = arith.constant 0 : i32
    %c0_i32_0 = arith.constant 0 : i32
    %c0_i32_1 = arith.constant 0 : i32
    return %arg0, %c0_i32, %c0_i32_0 : i32, i32, i32
  }
}

</mosaic_0001>

<llo_original>
// kernel: tpu_custom_call.1
$region0: #{tpu_custom_call.1}
  #allocation0 [shape = 'u32[]', space=smem, size = 0x4, offset = 0x4, fixed_abs, tag = 'smem constant byte address 0x4 - core index']
  #allocation1 [shape = 'u32[72,128]{1,0:T(1,128)}', space=vmem, size = 0x9000, scoped, tag = 'internal scratch']
  #allocation2 [shape = 'f32[1]{0:T(128)S(6)}', space=smem, size = 0x200, scoped, tag = 'scoped memory for tpu_custom_call.1']
  %s0 = inlined_call_operand.<no memory space> [shape: f32[1], index: 0, kind: input, shape index: {}]
  %s1 = inlined_call_operand.hbm [shape: f32[8,256], index: 1, kind: input, shape index: {}]
  %s2 = inlined_call_operand.hbm [shape: f32[1,1,8], index: 2, kind: output, shape index: {}]
  %s3 = sld [smem:[#allocation0]]
  $region22: #{tpu_custom_call.1} parent=0
    _
  %s5 = ssub.s32 1, %s3
  %s6 = scalar_select 0, %s5, %s3
  %7 = sst [smem:[#allocation2]] %s0
  $region1: #{tpu_custom_call.1} parent=0
    #allocation3 [shape = 'u8[8192]{0}', space=vmem, size = 0x2000, scoped, tag = 'input window, operand 1, single buffered']
    #allocation4 [shape = 's32[1]{0}', space=sflag, size = 0x4, scoped, tag = 'scoped memory for tpu_custom_call.1']
    #allocation5 [shape = 's32[1]{0}', space=sflag, size = 0x4, scoped, tag = 'scoped memory for tpu_custom_call.1']
    #allocation6 [shape = 'u8[512]{0}', space=vmem, size = 0x400, scoped, tag = 'output window, operand 0, single buffered']
    %8 = vsyncpa [#allocation4], 0
    %9 = vsyncpa [#allocation5], 0
    // Predicated region
    $region2: #{tpu_custom_call.1} parent=1 // pred_check
      _
    $region3: #{tpu_custom_call.1} parent=1 // pred_check_branch
      %11 = sbr.rel (0) target = $region5
    $region4: #{tpu_custom_call.1} parent=1 // pred_region
      _
    $region5: #{tpu_custom_call.1} parent=1 // pred_fallthru
      _
    // Predicated region
    $region6: #{tpu_custom_call.1} parent=1 // pred_check
      _
    $region7: #{tpu_custom_call.1} parent=1 // pred_check_branch
      %13 = sbr.rel (0) target = $region9
    $region8: #{tpu_custom_call.1} parent=1 // pred_region
      %15 = vsyncadd [#allocation4], 0
      %s17 = sshll.u32 %s1, 4
      %s18 = int_to_ptr.hbm [resolvable:$true] %s17
      %s19 = sshll.u32 [#allocation3], 4
      %s20 = int_to_ptr.vmem [resolvable:$true] %s19
      %22 = dma.hbm_to_vmem [thread:$0]  %s18, 256, %s20, [#allocation4]
    $region9: #{tpu_custom_call.1} parent=1 // pred_fallthru
      _
    // Predicated region
    $region10: #{tpu_custom_call.1} parent=1 // pred_check
      _
    $region11: #{tpu_custom_call.1} parent=1 // pred_check_branch
      %24 = sbr.rel (0) target = $region13
    $region12: #{tpu_custom_call.1} parent=1 // pred_region
      %26 = dma.done [#allocation4], 256
    $region13: #{tpu_custom_call.1} parent=1 // pred_fallthru
      _
    %s27 = sld [smem:[#allocation2]]
    %v28 = vstv %s27
    %v29 = vrcp.pop %v28
    %v30 = vmul.f32 %v28, %v29
    %v31 = vsub.f32 1.0, %v30
    %v32 = vmul.f32 %v29, %v31
    %v33 = vadd.f32 %v29, %v32
    %vm34 = vweird.f32 %v28
    %vm35 = vweird.f32 %v29
    %vm36 = vmor %vm34, %vm35
    %v37 = vsel %vm36, %v29, %v33
    %v38 = vand.u32 2147483647, %v28
    %vm39 = vcmp.eq.f32.partialorder %v38, 8.507059e+37
    %v40 = vand.u32 %v28, 2147483648
    %v41 = vor.u32 1.1754944e-38, %v40
    %v42 = vsel %vm39, %v41, %v37
    %s43 = vtos %v42
    %v44 = vld [vmem:[#allocation3] sm:$0xff]
    %v45 = vld [vmem:[#allocation3 + $0x8] sm:$0xff]
    %v46 = vmax.f32 %v44, 1e-06
    %v47 = vmax.f32 %v45, 1e-06
    %v48 = vstv %s27
    %v49 = vpow.f32 %v46, %v48
    %v50 = vpow.f32 %v47, %v48
    %v51 = vadd.f32 %v49, %v50
    %52 = vadd.xlane.f32.xlu0 %v51
    %v53 = vpop.xlane.xlu0 %52
    %v54 = vmul.f32 %v53, 0.00390625
    %v55 = vstv %s43
    %v56 = vpow.f32 %v54, %v55
    %v58 = vlaneseq
    %v59 = vand.u32 %v58, 127
    %v60 = vperm.slane %v56, %v59
    %vm62 = vcmask 57344
    %63 = vst.msk [vmem:[#allocation6] sm:$0x1] %vm62, %v60
    // Predicated region
    $region14: #{tpu_custom_call.1} parent=1 // pred_check
      _
    $region15: #{tpu_custom_call.1} parent=1 // pred_check_branch
      %65 = sbr.rel (0) target = $region17
    $region16: #{tpu_custom_call.1} parent=1 // pred_region
      %67 = vsyncadd [#allocation5], 0
      %s69 = sshll.u32 [#allocation6], 4
      %s70 = int_to_ptr.vmem [resolvable:$true] %s69
      %s71 = sshll.u32 %s2, 4
      %s72 = int_to_ptr.hbm [resolvable:$true] %s71
      %74 = dma.vmem_to_hbm [thread:$0]  %s70, 16, %s72, [#allocation5]
    $region17: #{tpu_custom_call.1} parent=1 // pred_fallthru
      _
    // Predicated region
    $region18: #{tpu_custom_call.1} parent=1 // pred_check
      _
    $region19: #{tpu_custom_call.1} parent=1 // pred_check_branch
      %76 = sbr.rel (0) target = $region21
    $region20: #{tpu_custom_call.1} parent=1 // pred_region
      %78 = dma.done [#allocation5], 16
    $region21: #{tpu_custom_call.1} parent=1 // pred_fallthru
      _
    %79 = vsyncpa [#allocation4], 1
    %80 = vsyncpa [#allocation5], 1

</llo_original>
